<compile_context>
chip_gen: v5e
topology: v5e:2x2
jax: 0.10.0
libtpu: 0.0.40
codegen_flags: <defaults>
</compile_context>

<pallas_src>
import jax
import jax.numpy as jnp
from jax.experimental import pallas as pl
from jax.experimental.pallas import tpu as pltpu

# Fits v7x's 64 MiB physical VMEM with headroom, and is well above the 16/32 MiB scoped
# defaults that the larger tiles below would otherwise hit on v5e/v6e.
_VMEM_LIMIT_BYTES = 48 * 1024 * 1024


def _round_up(x, m):
    return (x + m - 1) // m * m


# ---------------------------------------------------------------------------
# Generic tiled matmul + bias (bf16 MXU operands, f32 accumulate).
# Used for BOTH the hoisted input projection and the detached vocab head.
# ---------------------------------------------------------------------------
def _matmul_bias_kernel_noacc(a_ref, w_ref, b_ref, o_ref):
    # Whole K fits one tile: no zero-init, no accumulator scratch, no copy-out.
    acc = jnp.dot(a_ref[...].astype(jnp.bfloat16), w_ref[...].astype(jnp.bfloat16),
                  preferred_element_type=jnp.float32)
    o_ref[...] = (acc + b_ref[...]).astype(o_ref.dtype)


def _matmul_bias_kernel_acc(a_ref, w_ref, b_ref, o_ref, acc_ref):
    # K split across grid axis 2 -> f32 accumulator in VMEM scratch.
    k = pl.program_id(2)

    @pl.when(k == 0)
    def _():
        acc_ref[...] = jnp.zeros_like(acc_ref)

    acc_ref[...] += jnp.dot(a_ref[...].astype(jnp.bfloat16),
                            w_ref[...].astype(jnp.bfloat16),
                            preferred_element_type=jnp.float32)

    @pl.when(k == pl.num_programs(2) - 1)
    def _():
        o_ref[...] = (acc_ref[...] + b_ref[...]).astype(o_ref.dtype)


def matmul_bias(a, w, b, *, tm=256, tn=512, tk=512, out_dtype=jnp.float32):
    """a: (M, K), w: (K, N), b: (1, N) -> a @ w + b. MXU in bf16, f32 accumulation."""
    M, K = a.shape
    Kw, N = w.shape
    assert K == Kw and b.shape == (1, N)

    # Tile sizes: never larger than the padded dims, always (8,128)/MXU aligned.
    tm = min(tm, _round_up(M, 8))
    tn = min(tn, _round_up(N, 128))
    Kp = _round_up(K, 128)
    if Kp <= tk:
        tk = Kp                       # whole K in one tile -> accumulator-free kernel
    else:
        Kp = _round_up(K, tk)
    Mp, Np = _round_up(M, tm), _round_up(N, tn)

    # Pad to tile multiples (zero K/N padding is numerically inert) instead of the old
    # full-extent fallback that could blow VMEM / serialize into one giant block.
    if (Mp, Kp) != (M, K):
        a = jnp.pad(a, ((0, Mp - M), (0, Kp - K)))
    if (Kp, Np) != (K, N):
        w = jnp.pad(w, ((0, Kp - K), (0, Np - N)))
    if Np != N:
        b = jnp.pad(b, ((0, 0), (0, Np - N)))

    if Kp == tk:
        out = pl.pallas_call(
            _matmul_bias_kernel_noacc,
            out_shape=jax.ShapeDtypeStruct((Mp, Np), out_dtype),
            grid_spec=pltpu.PrefetchScalarGridSpec(
                num_scalar_prefetch=0,
                grid=(Mp // tm, Np // tn),
                in_specs=[
                    pl.BlockSpec((tm, Kp), lambda i, j: (i, 0)),
                    pl.BlockSpec((Kp, tn), lambda i, j: (0, j)),
                    pl.BlockSpec((1, tn), lambda i, j: (0, j)),
                ],
                out_specs=pl.BlockSpec((tm, tn), lambda i, j: (i, j)),
            ),
            compiler_params=pltpu.CompilerParams(
                dimension_semantics=("parallel", "parallel"),
                vmem_limit_bytes=_VMEM_LIMIT_BYTES),
        )(a, w, b)
    else:
        out = pl.pallas_call(
            _matmul_bias_kernel_acc,
            out_shape=jax.ShapeDtypeStruct((Mp, Np), out_dtype),
            grid_spec=pltpu.PrefetchScalarGridSpec(
                num_scalar_prefetch=0,
                grid=(Mp // tm, Np // tn, Kp // tk),
                in_specs=[
                    pl.BlockSpec((tm, tk), lambda i, j, k: (i, k)),
                    pl.BlockSpec((tk, tn), lambda i, j, k: (k, j)),
                    pl.BlockSpec((1, tn), lambda i, j, k: (0, j)),
                ],
                out_specs=pl.BlockSpec((tm, tn), lambda i, j, k: (i, j)),
                scratch_shapes=[pltpu.VMEM((tm, tn), jnp.float32)],
            ),
            compiler_params=pltpu.CompilerParams(
                dimension_semantics=("parallel", "parallel", "arbitrary"),
                vmem_limit_bytes=_VMEM_LIMIT_BYTES),
        )(a, w, b)

    return out[:M, :N] if (Mp, Np) != (M, N) else out


# ---------------------------------------------------------------------------
# LSTM recurrence kernel. The input projection is already folded into gates_x,
# so each serial time step only does: gates = gates_x[t] + h @ W_hh, then the
# gate math. Tb time steps per grid iteration; h/c persist in f32 VMEM scratch.
# ---------------------------------------------------------------------------
def lstm_recurrence(gates_x, w_hh_t, *, time_block=8, out_dtype=jnp.bfloat16):
    """gates_x: (T, B, 4H) time-major bf16 (x @ W_ih^T + b folded in),
    w_hh_t: (H, 4H) bf16. Returns hidden (T, B, H) time-major."""
    T, B, G = gates_x.shape
    H = w_hh_t.shape[0]
    assert G == 4 * H

    # Pad time to a multiple of the time block (never let Tb degrade to 1).
    Tb = min(time_block, T)
    T_pad = _round_up(T, Tb)
    if T_pad != T:
        gates_x = jnp.pad(gates_x, ((0, T_pad - T), (0, 0), (0, 0)))

    # v7x megacore: split the batch into two "parallel" blocks (one per TensorCore)
    # when each half stays a bf16-tileable (multiple-of-16) sublane block.
    # No effect on v5e/v6e (1 TC) beyond one extra cheap W_hh reload.
    Bb = B // 2 if (B >= 32 and (B // 2) % 16 == 0) else B

    # vreg-pressure guard: per-step gates live set is Bb x 4H f32; full unroll only
    # while it stays comfortably inside the 256 KiB vreg file.
    unroll = True if Bb * 4 * H * 4 <= 64 * 1024 else 2

    def kernel(gx_ref, whh_hbm, hid_ref, whh_vmem, h_sc, c_sc, dma_sem):
        # NOTE: correctness requires the TIME axis to be the innermost grid axis and
        # marked "arbitrary": h_sc/c_sc carry across time blocks and are re-initialized
        # at t_blk == 0 for every batch block. Do not reorder the grid.
        t_blk = pl.program_id(1)

        @pl.when(t_blk == 0)
        def _():
            # Single-buffered, loop-invariant W_hh: one DMA per batch block instead of
            # a double-buffered BlockSpec stream on every grid step.
            cp = pltpu.make_async_copy(whh_hbm, whh_vmem, dma_sem)
            cp.start()
            cp.wait()
            h_sc[...] = jnp.zeros_like(h_sc)
            c_sc[...] = jnp.zeros_like(c_sc)

        def step(i, carry):
            # bf16 MXU operands, f32 accumulation; gate math stays f32.
            gates = (gx_ref[i].astype(jnp.float32)
                     + jnp.dot(h_sc[...].astype(jnp.bfloat16), whh_vmem[...],
                               preferred_element_type=jnp.float32))
            # PyTorch LSTM gate order: input, forget, cell(g), output.
            # H is a multiple of 128 -> lane-tile-aligned slices, unmasked ops.
            i_g = jax.nn.sigmoid(gates[:, 0 * H:1 * H])
            f_g = jax.nn.sigmoid(gates[:, 1 * H:2 * H])
            g_g = jnp.tanh(gates[:, 2 * H:3 * H])
            o_g = jax.nn.sigmoid(gates[:, 3 * H:4 * H])
            c_new = f_g * c_sc[...] + i_g * g_g
            h_new = o_g * jnp.tanh(c_new)
            c_sc[...] = c_new
            h_sc[...] = h_new
            hid_ref[i] = h_new.astype(hid_ref.dtype)
            return carry

        jax.lax.fori_loop(0, Tb, step, 0, unroll=unroll)

    hidden = pl.pallas_call(
        kernel,
        out_shape=jax.ShapeDtypeStruct((T_pad, B, H), out_dtype),
        grid_spec=pltpu.PrefetchScalarGridSpec(
            num_scalar_prefetch=0,
            grid=(B // Bb, T_pad // Tb),            # time innermost (see NOTE above)
            in_specs=[
                pl.BlockSpec((Tb, Bb, 4 * H), lambda b, t: (t, b, 0)),  # gates_x block
                pl.BlockSpec(memory_space=pl.ANY),   # W_hh stays in HBM; DMA'd once
            ],
            out_specs=pl.BlockSpec((Tb, Bb, H), lambda b, t: (t, b, 0)),
            scratch_shapes=[
                pltpu.VMEM((H, 4 * H), w_hh_t.dtype),   # single-buffered W_hh
                pltpu.VMEM((Bb, H), jnp.float32),       # h state (f32)
                pltpu.VMEM((Bb, H), jnp.float32),       # c state (f32)
                pltpu.SemaphoreType.DMA(()),
            ],
        ),
        compiler_params=pltpu.CompilerParams(
            dimension_semantics=("parallel", "arbitrary"),
            vmem_limit_bytes=_VMEM_LIMIT_BYTES),
    )(gates_x, w_hh_t)

    return hidden[:T] if T_pad != T else hidden


# ---------------------------------------------------------------------------
# Full forward pass: Embedding -> LSTM -> Linear head.
# ---------------------------------------------------------------------------
def lstm_model_forward(ids, params, *, time_block=8):
    """ids: (B, T) int32 -> logits (B, T, V) f32 (matches batch_first PyTorch)."""
    embed_tbl = params["embed"]          # (V, E) bf16, pad row is zero
    B, T = ids.shape
    V, E = embed_tbl.shape
    H = params["w_hh_t"].shape[0]

    # Embedding gather directly time-major: (T, B, E) bf16 — no HBM transpose.
    # TODO(synk): fuse the gather into the input-projection kernel via scalar-prefetched
    # ids + a pl.Element row-gather BlockSpec for larger embedding dims.
    x_tm = jnp.take(embed_tbl, ids.T, axis=0)

    # 1) Hoisted input projection: one fully parallel matmul with M = T*B, emitted
    #    in bf16 to halve the HBM round-trip into the recurrence (bias added in f32).
    gates_x = matmul_bias(x_tm.reshape(T * B, E), params["w_ih_t"], params["b"],
                          out_dtype=jnp.bfloat16)
    gates_x = gates_x.reshape(T, B, 4 * H)

    # 2) Serial recurrence: per step only h @ W_hh + elementwise gate math.
    hidden_tm = lstm_recurrence(gates_x, params["w_hh_t"], time_block=time_block)

    # 3) Detached vocab head: fully parallel matmul over all B*T positions.
    #    Transpose the small H-wide bf16 hidden (cheap), never the V-wide logits.
    # TODO(synk): fold this transpose into the recurrence output layout (batch-first
    # stores) to save one HBM pass over B*T*H.
    hidden_bf = jnp.transpose(hidden_tm, (1, 0, 2)).reshape(B * T, H)
    logits = matmul_bias(hidden_bf, params["w_out_t"], params["b_out"],
                         out_dtype=jnp.float32)
    return logits.reshape(B, T, V)


# ---------------------------------------------------------------------------
# Parameter init (mirrors nn.Embedding(padding_idx), nn.LSTM, nn.Linear layouts),
# bf16 kernel-param packing, and a pure-JAX f32 reference for correctness.
# ---------------------------------------------------------------------------
def init_params(key, vocab_size, embed_size, hidden_size, pad_id=0):
    ks = jax.random.split(key, 7)
    scale = 0.1
    embed = scale * jax.random.normal(ks[0], (vocab_size, embed_size), jnp.float32)
    embed = embed.at[pad_id].set(0.0)  # padding_idx row is zero in PyTorch Embedding

    w_ih = scale * jax.random.normal(ks[1], (4 * hidden_size, embed_size), jnp.float32)
    w_hh = scale * jax.random.normal(ks[2], (4 * hidden_size, hidden_size), jnp.float32)
    b_ih = scale * jax.random.normal(ks[3], (4 * hidden_size,), jnp.float32)
    b_hh = scale * jax.random.normal(ks[4], (4 * hidden_size,), jnp.float32)

    w_out = scale * jax.random.normal(ks[5], (vocab_size, hidden_size), jnp.float32)
    b_out = scale * jax.random.normal(ks[6], (vocab_size,), jnp.float32)

    return {
        "embed": embed,                         # (V, E)
        "w_ih_t": w_ih.T,                       # (E, 4H)
        "w_hh_t": w_hh.T,                       # (H, 4H)
        "b": (b_ih + b_hh).reshape(1, -1),      # (1, 4H)  f32
        "w_out_t": w_out.T,                     # (H, V)
        "b_out": b_out.reshape(1, -1),          # (1, V)   f32
    }


def to_kernel_params(p):
    """bf16 MXU operands; biases stay f32 (added in the f32 epilogue)."""
    return {
        "embed": p["embed"].astype(jnp.bfloat16),
        "w_ih_t": p["w_ih_t"].astype(jnp.bfloat16),
        "w_hh_t": p["w_hh_t"].astype(jnp.bfloat16),
        "b": p["b"],
        "w_out_t": p["w_out_t"].astype(jnp.bfloat16),
        "b_out": p["b_out"],
    }


def reference_forward(ids, params):
    """Pure-JAX f32 reference of the same forward pass."""
    x = jnp.take(params["embed"], ids, axis=0)   # (B, T, E)
    B, T, E = x.shape
    H = params["w_hh_t"].shape[0]

    def step(carry, x_t):
        h, c = carry
        gates = x_t @ params["w_ih_t"] + h @ params["w_hh_t"] + params["b"]
        i = jax.nn.sigmoid(gates[:, 0 * H:1 * H])
        f = jax.nn.sigmoid(gates[:, 1 * H:2 * H])
        g = jnp.tanh(gates[:, 2 * H:3 * H])
        o = jax.nn.sigmoid(gates[:, 3 * H:4 * H])
        c = f * c + i * g
        h = o * jnp.tanh(c)
        return (h, c), h

    h0 = jnp.zeros((B, H), jnp.float32)
    c0 = jnp.zeros((B, H), jnp.float32)
    _, hs = jax.lax.scan(step, (h0, c0), jnp.transpose(x, (1, 0, 2)))
    hidden = jnp.transpose(hs, (1, 0, 2))        # (B, T, H)
    return hidden @ params["w_out_t"] + params["b_out"]


if __name__ == "__main__":
    # Small but hardware-aligned shapes: B multiple of 16 (bf16 sublane tile),
    # H / V multiples of 128 (lanes); H matches the module's default hidden_size=256.
    VOCAB, EMBED, HIDDEN, PAD = 256, 64, 256, 0
    B, T = 16, 16

    key = jax.random.PRNGKey(0)
    k_ids, k_params = jax.random.split(key)
    ids = jax.random.randint(k_ids, (B, T), 0, VOCAB, dtype=jnp.int32)
    params_f32 = init_params(k_params, VOCAB, EMBED, HIDDEN, PAD)
    params = to_kernel_params(params_f32)

    logits = jax.block_until_ready(lstm_model_forward(ids, params, time_block=8))
    ref = jax.block_until_ready(reference_forward(ids, params_f32))

    assert logits.shape == (B, T, VOCAB), logits.shape
    # bf16 MXU operands with f32 accumulation: loose tolerance vs. the pure-f32 reference.
    err = float(jnp.max(jnp.abs(logits - ref)))
    assert err < 3e-2, f"max abs err {err} vs f32 reference"
    print("KERNEL_OK")
</pallas_src>

<mosaic_0001>
module attributes {stable_mosaic.version = 11 : i64} {
  func.func @_matmul_bias_kernel_noacc(%arg0: i32, %arg1: i32, %arg2: memref<256x128xbf16, #tpu.memory_space<vmem>>, %arg3: memref<128x512xbf16, #tpu.memory_space<vmem>>, %arg4: memref<1x512xf32, #tpu.memory_space<vmem>>, %arg5: memref<256x512xbf16, #tpu.memory_space<vmem>>) attributes {dimension_semantics = [#tpu.dimension_semantics<parallel>, #tpu.dimension_semantics<parallel>], iteration_bounds = array<i64: 1, 2>, scalar_prefetch = 0 : i64, scratch_operands = 0 : i64, tpu.core_type = #tpu.core_type<tc>, window_params = [{transform_indices = @transform_0, window_bounds = array<i64: 256, 128>}, {transform_indices = @transform_1, window_bounds = array<i64: 128, 512>}, {transform_indices = @transform_2, window_bounds = array<i64: 1, 512>}, {transform_indices = @transform_3, window_bounds = array<i64: 256, 512>}]} {
    %c0 = arith.constant 0 : index
    %c0_0 = arith.constant 0 : index
    %0 = vector.load %arg2[%c0, %c0_0] : memref<256x128xbf16, #tpu.memory_space<vmem>>, vector<256x128xbf16>
    %c0_1 = arith.constant 0 : index
    %c0_2 = arith.constant 0 : index
    %1 = vector.load %arg3[%c0_1, %c0_2] : memref<128x512xbf16, #tpu.memory_space<vmem>>, vector<128x512xbf16>
    %cst = arith.constant dense<0.000000e+00> : vector<256x512xf32>
    %2 = tpu.matmul %0, %1, %cst {dimension_numbers = #tpu.dot_dimension_numbers<[1], [0], [0], [1], [0, 0, 1, 1], [], []>} : vector<256x128xbf16>, vector<128x512xbf16>, vector<256x512xf32> -> vector<256x512xf32>
    %c0_3 = arith.constant 0 : index
    %c0_4 = arith.constant 0 : index
    %3 = vector.load %arg4[%c0_3, %c0_4] : memref<1x512xf32, #tpu.memory_space<vmem>>, vector<1x512xf32>
    %4 = vector.broadcast %3 : vector<1x512xf32> to vector<256x512xf32>
    %5 = arith.addf %2, %4 : vector<256x512xf32>
    %6 = arith.truncf %5 : vector<256x512xf32> to vector<256x512xbf16>
    %c0_5 = arith.constant 0 : index
    %c0_6 = arith.constant 0 : index
    %7 = vector.load %arg5[%c0_5, %c0_6] : memref<256x512xbf16, #tpu.memory_space<vmem>>, vector<256x512xbf16>
    tpu.vector_store %arg5[%c0_5, %c0_6], %6 {strides = array<i32>} : memref<256x512xbf16, #tpu.memory_space<vmem>>, vector<256x512xbf16>,
    return
  }
  func.func @transform_0(%arg0: i32, %arg1: i32) -> (i32, i32) {
    %c0_i32 = arith.constant 0 : i32
    %c0_i32_0 = arith.constant 0 : i32
    return %arg0, %c0_i32 : i32, i32
  }
  func.func @transform_1(%arg0: i32, %arg1: i32) -> (i32, i32) {
    %c0_i32 = arith.constant 0 : i32
    %c0_i32_0 = arith.constant 0 : i32
    return %c0_i32, %arg1 : i32, i32
  }
  func.func @transform_2(%arg0: i32, %arg1: i32) -> (i32, i32) {
    %c0_i32 = arith.constant 0 : i32
    %c0_i32_0 = arith.constant 0 : i32
    return %c0_i32, %arg1 : i32, i32
  }
  func.func @transform_3(%arg0: i32, %arg1: i32) -> (i32, i32) {
    %c0_i32 = arith.constant 0 : i32
    return %arg0, %arg1 : i32, i32
  }
}

</mosaic_0001>

<llo_original>
// kernel: tpu_custom_call.1
$region0: #{tpu_custom_call.1}
  #allocation0 [shape = 'u32[]', space=smem, size = 0x4, offset = 0x4, fixed_abs, tag = 'smem constant byte address 0x4 - core index']
  #allocation1 [shape = 'u32[72,128]{1,0:T(1,128)}', space=vmem, size = 0x9000, scoped, tag = 'internal scratch']
  %s0 = inlined_call_operand.hbm [shape: bf16[256,128], index: 0, kind: input, shape index: {}]
  %s1 = inlined_call_operand.hbm [shape: bf16[128,1024], index: 1, kind: input, shape index: {}]
  %s2 = inlined_call_operand.hbm [shape: f32[1,1024], index: 2, kind: input, shape index: {}]
  %s3 = inlined_call_operand.hbm [shape: bf16[256,1024], index: 3, kind: output, shape index: {}]
  %s4 = sld [smem:[#allocation0]]
  $region57: #{tpu_custom_call.1} parent=0
    _
  %s6 = ssub.s32 1, %s4
  %s7 = scalar_select 0, %s6, %s4
  $region1: #{tpu_custom_call.1} parent=0
    #allocation2 [shape = 'u8[65536]{0}', space=vmem, size = 0x10000, scoped, tag = 'input window, operand 0, single buffered']
    #allocation3 [shape = 's32[2]{0}', space=sflag, size = 0x8, scoped, tag = 'scoped memory for tpu_custom_call.1']
    #allocation4 [shape = 's32[2]{0}', space=sflag, size = 0x8, scoped, tag = 'scoped memory for tpu_custom_call.1']
    #allocation5 [shape = 'u8[262144]{0}', space=vmem, size = 0x40000, scoped, tag = 'input window, operand 1']
    #allocation6 [shape = 's32[2]{0}', space=sflag, size = 0x8, scoped, tag = 'scoped memory for tpu_custom_call.1']
    #allocation7 [shape = 'u8[4096]{0}', space=vmem, size = 0x1000, scoped, tag = 'input window, operand 2']
    #allocation8 [shape = 'u8[524288]{0}', space=vmem, size = 0x80000, scoped, tag = 'output window, operand 0']
    %8 = vsyncpa [#allocation3], 0
    %9 = vsyncpa [#allocation6], 0
    %s10 = scalar_lea.sflag [#allocation6], 1
    %11 = vsyncpa %s10, 0
    %12 = vsyncpa [#allocation4], 0
    %s13 = scalar_lea.sflag [#allocation4], 1
    %14 = vsyncpa %s13, 0
    loop: start=0, step=1, limit=4
    $region2: #{tpu_custom_call.1} parent=1 // loop_pre_header
      _
    $region3: #{tpu_custom_call.1} parent=1 // loop_header
      %s16 = sphi 0, %s20
      %p17 = scmp.ge.s32.totalorder %s16, 4
      %s23 = sphi 0, %s35
      %s24 = sphi 0, %s31
      %s25 = sphi 0, %s23
      %s26 = sphi 0, %s24
      %s27 = sphi 0, %s25
      %s28 = sphi 0, %s26
      %s38 = sphi 0, %s40
      %s41 = sphi 0, %s38
      %s42 = sphi 0, %s41
      %s58 = sphi 0, %s42
      %s64 = sphi 0, %s66
      %s67 = sphi 0, %s64
      %s68 = sphi 0, %s67
      %s84 = sphi 0, %s68
      %s90 = sphi 0, %s92
      %s93 = sphi 0, %s90
      %s94 = sphi 0, %s93
      %s110 = sphi 0, %s94
      %s118 = sphi 0, %s120
      %s121 = sphi 0, %s118
      %s122 = sphi 0, %s121
      %s138 = sphi 0, %s122
    $region4: #{tpu_custom_call.1} parent=1 // loop_header_branch
      %19 = sbr.rel (%p17) target = $region8
    $region5: #{tpu_custom_call.1} parent=1 // loop_body
      %s21 = ssub.s32 %s16, 1
      %s22 = ssub.s32 %s16, 2
      %s29 = sadd.s32 1, %s24
      %p30 = scmp.ge.s32.totalorder %s29, 2
      %s31 = scalar_select %p30, 0, %s29
      %s32 = sadd.s32 1, %s23
      %s33 = scalar_select %p30, %s32, %s23
      %p34 = scmp.ge.s32.totalorder %s33, 1
      %s35 = scalar_select %p34, 0, %s33
      %s36 = ssub.s32 %s23, %s35
      %p37 = scmp.eq.s32.totalorder %s36, 0
      %s39 = sadd.s32 %s38, 1
      %s40 = scalar_select %p37, %s38, %s39
      %p43 = pneg %p37
      %p44 = scmp.eq.s32.totalorder %s16, 1
      %p45 = por %p43, %p44
      %p46 = scmp.ne.s32.totalorder %s38, %s41
      %p47 = scmp.eq.s32.totalorder %s16, 0
      %p48 = por %p46, %p47
      %p49 = scmp.ne.s32.totalorder %s38, %s41
      %p50 = scmp.eq.s32.totalorder %s21, 1
      %p51 = por %p49, %p50
      %p52 = scmp.ne.s32.totalorder %s41, %s42
      %p53 = scmp.eq.s32.totalorder %s21, 0
      %p54 = por %p52, %p53
      %p55 = scmp.ne.s32.totalorder %s41, %s42
      %p56 = scmp.eq.s32.totalorder %s22, 1
      %p57 = por %p55, %p56
      %p59 = scmp.ne.s32.totalorder %s42, %s58
      %p60 = scmp.eq.s32.totalorder %s22, 0
      %p61 = por %p59, %p60
      %s62 = ssub.s32 %s24, %s31
      %p63 = scmp.eq.s32.totalorder %s62, 0
      %s65 = sadd.s32 %s64, 1
      %s66 = scalar_select %p63, %s64, %s65
      %p69 = pneg %p63
      %p70 = scmp.eq.s32.totalorder %s16, 1
      %p71 = por %p69, %p70
      %p72 = scmp.ne.s32.totalorder %s64, %s67
      %p73 = scmp.eq.s32.totalorder %s16, 0
      %p74 = por %p72, %p73
      %p75 = scmp.ne.s32.totalorder %s64, %s67
      %p76 = scmp.eq.s32.totalorder %s21, 1
      %p77 = por %p75, %p76
      %p78 = scmp.ne.s32.totalorder %s67, %s68
      %p79 = scmp.eq.s32.totalorder %s21, 0
      %p80 = por %p78, %p79
      %p81 = scmp.ne.s32.totalorder %s67, %s68
      %p82 = scmp.eq.s32.totalorder %s22, 1
      %p83 = por %p81, %p82
      %p85 = scmp.ne.s32.totalorder %s68, %s84
      %p86 = scmp.eq.s32.totalorder %s22, 0
      %p87 = por %p85, %p86
      %s88 = ssub.s32 %s24, %s31
      %p89 = scmp.eq.s32.totalorder %s88, 0
      %s91 = sadd.s32 %s90, 1
      %s92 = scalar_select %p89, %s90, %s91
      %p95 = pneg %p89
      %p96 = scmp.eq.s32.totalorder %s16, 1
      %p97 = por %p95, %p96
      %p98 = scmp.ne.s32.totalorder %s90, %s93
      %p99 = scmp.eq.s32.totalorder %s16, 0
      %p100 = por %p98, %p99
      %p101 = scmp.ne.s32.totalorder %s90, %s93
      %p102 = scmp.eq.s32.totalorder %s21, 1
      %p103 = por %p101, %p102
      %p104 = scmp.ne.s32.totalorder %s93, %s94
      %p105 = scmp.eq.s32.totalorder %s21, 0
      %p106 = por %p104, %p105
      %p107 = scmp.ne.s32.totalorder %s93, %s94
      %p108 = scmp.eq.s32.totalorder %s22, 1
      %p109 = por %p107, %p108
      %p111 = scmp.ne.s32.totalorder %s94, %s110
      %p112 = scmp.eq.s32.totalorder %s22, 0
      %p113 = por %p111, %p112
      %s114 = ssub.s32 %s23, %s35
      %s115 = ssub.s32 %s24, %s31
      %s116 = sor.u32 %s114, %s115
      %p117 = scmp.eq.s32.totalorder %s116, 0
      %s119 = sadd.s32 %s118, 1
      %s120 = scalar_select %p117, %s118, %s119
      %p123 = pneg %p117
      %p124 = scmp.eq.s32.totalorder %s16, 1
      %p125 = por %p123, %p124
      %p126 = scmp.ne.s32.totalorder %s118, %s121
      %p127 = scmp.eq.s32.totalorder %s16, 0
      %p128 = por %p126, %p127
      %p129 = scmp.ne.s32.totalorder %s118, %s121
      %p130 = scmp.eq.s32.totalorder %s21, 1
      %p131 = por %p129, %p130
      %p132 = scmp.ne.s32.totalorder %s121, %s122
      %p133 = scmp.eq.s32.totalorder %s21, 0
      %p134 = por %p132, %p133
      %p135 = scmp.ne.s32.totalorder %s121, %s122
      %p136 = scmp.eq.s32.totalorder %s22, 1
      %p137 = por %p135, %p136
      %p139 = scmp.ne.s32.totalorder %s122, %s138
      %p140 = scmp.eq.s32.totalorder %s22, 0
      %p141 = por %p139, %p140
      %p142 = scmp.le.s32.totalorder 1, %s16
      %p143 = scmp.lt.s32.totalorder %s16, 3
      %p144 = pnand %p142, %p143
      %p145 = pneg %p144
      // Predicated region
      $region9: #{tpu_custom_call.1} parent=5 // pred_check
        _
      $region10: #{tpu_custom_call.1} parent=5 // pred_check_branch
        %147 = sbr.rel (%p144) target = $region12
      $region11: #{tpu_custom_call.1} parent=5 // pred_region
        %s148 = ssub.s32 %s16, 1
        // Predicated region
        $region13: #{tpu_custom_call.1} parent=11 // pred_check
          %p149 = pneg %p54
        $region14: #{tpu_custom_call.1} parent=11 // pred_check_branch
          %151 = sbr.rel (%p149) target = $region16
        $region15: #{tpu_custom_call.1} parent=11 // pred_region
          %s152 = smul.u32 32, %s25
          %154 = vsyncadd [#allocation3], 0
          %s155 = smul.addr %s152, 4
          %s156 = scalar_lea.hbm %s0, %s155
          %s157 = sshll.u32 %s156, 4
          %s158 = int_to_ptr.hbm [resolvable:$true] %s157
          %s159 = sshll.u32 [#allocation2], 4
          %s160 = int_to_ptr.vmem [resolvable:$true] %s159
          %165 = dma.hbm_to_vmem [thread:$0]  %s158, 2048, %s160, [#allocation3], 64, 64, 4
        $region16: #{tpu_custom_call.1} parent=11 // pred_fallthru
          _
      $region12: #{tpu_custom_call.1} parent=5 // pred_fallthru
        _
      %p166 = scmp.lt.s32.totalorder %s16, 2
      // Predicated region
      $region17: #{tpu_custom_call.1} parent=5 // pred_check
        %p167 = pneg %p166
      $region18: #{tpu_custom_call.1} parent=5 // pred_check_branch
        %169 = sbr.rel (%p167) target = $region20
      $region19: #{tpu_custom_call.1} parent=5 // pred_region
        // Predicated region
        $region21: #{tpu_custom_call.1} parent=19 // pred_check
          %p170 = pneg %p74
        $region22: #{tpu_custom_call.1} parent=19 // pred_check_branch
          %172 = sbr.rel (%p170) target = $region24
        $region23: #{tpu_custom_call.1} parent=19 // pred_region
          %s173 = sand.u32 %s16, 1
          %s174 = scalar_lea.sflag [#allocation6], %s173
          %s175 = sand.u32 %s64, 1
          %s176 = smul.addr %s175, 256
          %s177 = scalar_lea.vmem [#allocation5], %s176
          %s178 = smul.u32 4, %s24
          %180 = vsyncadd %s174, 0
          %s181 = smul.addr %s178, 4
          %s182 = scalar_lea.hbm %s1, %s181
          %s183 = sshll.u32 %s182, 4
          %s184 = int_to_ptr.hbm [resolvable:$true] %s183
          %s185 = sshll.u32 %s177, 4
          %s186 = int_to_ptr.vmem [resolvable:$true] %s185
          %191 = dma.hbm_to_vmem [thread:$0]  %s184, 4096, %s186, %s174, 512, 256, 16
        $region24: #{tpu_custom_call.1} parent=19 // pred_fallthru
          _
        // Predicated region
        $region25: #{tpu_custom_call.1} parent=19 // pred_check
          %p192 = pneg %p100
        $region26: #{tpu_custom_call.1} parent=19 // pred_check_branch
          %194 = sbr.rel (%p192) target = $region28
        $region27: #{tpu_custom_call.1} parent=19 // pred_region
          %s195 = sand.u32 %s16, 1
          %s196 = scalar_lea.sflag [#allocation6], %s195
          %s197 = sand.u32 %s90, 1
          %s198 = smul.addr %s197, 4
          %s199 = scalar_lea.vmem [#allocation7], %s198
          %s200 = smul.u32 4, %s24
          %202 = vsyncadd %s196, 0
          %s203 = scalar_lea.hbm %s2, %s200
          %s205 = sshll.u32 %s203, 4
          %s206 = int_to_ptr.hbm [resolvable:$true] %s205
          %s207 = sshll.u32 %s199, 4
          %s208 = int_to_ptr.vmem [resolvable:$true] %s207
          %210 = dma.hbm_to_vmem [thread:$0]  %s206, 64, %s208, %s196
        $region28: #{tpu_custom_call.1} parent=19 // pred_fallthru
          _
      $region20: #{tpu_custom_call.1} parent=5 // pred_fallthru
        _
      %p211 = scmp.le.s32.totalorder 1, %s16
      %p212 = scmp.lt.s32.totalorder %s16, 3
      %p213 = pnand %p211, %p212
      %p214 = pneg %p213
      // Predicated region
      $region29: #{tpu_custom_call.1} parent=5 // pred_check
        _
      $region30: #{tpu_custom_call.1} parent=5 // pred_check_branch
        %216 = sbr.rel (%p213) target = $region32
      $region31: #{tpu_custom_call.1} parent=5 // pred_region
        %s217 = ssub.s32 %s16, 1
        // Predicated region
        $region33: #{tpu_custom_call.1} parent=31 // pred_check
          %p218 = pneg %p54
        $region34: #{tpu_custom_call.1} parent=31 // pred_check_branch
          %220 = sbr.rel (%p218) target = $region36
        $region35: #{tpu_custom_call.1} parent=31 // pred_region
          %222 = dma.done [#allocation3], 2048
        $region36: #{tpu_custom_call.1} parent=31 // pred_fallthru
          _
        %s223 = sand.u32 %s21, 1
        %s224 = scalar_lea.sflag [#allocation6], %s223
        %s225 = sand.u32 %s67, 1
        %s226 = smul.addr %s225, 256
        %s227 = scalar_lea.vmem [#allocation5], %s226
        // Predicated region
        $region37: #{tpu_custom_call.1} parent=31 // pred_check
          %p228 = pneg %p80
        $region38: #{tpu_custom_call.1} parent=31 // pred_check_branch
          %230 = sbr.rel (%p228) target = $region40
        $region39: #{tpu_custom_call.1} parent=31 // pred_region
          %232 = dma.done %s224, 4096
        $region40: #{tpu_custom_call.1} parent=31 // pred_fallthru
          _
        %s233 = sand.u32 %s21, 1
        %s234 = scalar_lea.sflag [#allocation6], %s233
        %s235 = sand.u32 %s93, 1
        %s236 = smul.addr %s235, 4
        %s237 = scalar_lea.vmem [#allocation7], %s236
        // Predicated region
        $region41: #{tpu_custom_call.1} parent=31 // pred_check
          %p238 = pneg %p106
        $region42: #{tpu_custom_call.1} parent=31 // pred_check_branch
          %240 = sbr.rel (%p238) target = $region44
        $region43: #{tpu_custom_call.1} parent=31 // pred_region
          %242 = dma.done %s234, 64
        $region44: #{tpu_custom_call.1} parent=31 // pred_fallthru
          _
        %p243 = pneg %p54
        %p244 = pneg %p51
        %s245 = sand.u32 %s21, 1
        %s246 = scalar_lea.sflag [#allocation6], %s245
        %s247 = sand.u32 %s67, 1
        %s248 = smul.addr %s247, 256
        %s249 = scalar_lea.vmem [#allocation5], %s248
        %p250 = pneg %p80
        %p251 = pneg %p77
        %s252 = sand.u32 %s21, 1
        %s253 = scalar_lea.sflag [#allocation6], %s252
        %s254 = sand.u32 %s93, 1
        %s255 = smul.addr %s254, 4
        %s256 = scalar_lea.vmem [#allocation7], %s255
        %p257 = pneg %p106
        %p258 = pneg %p103
        %p259 = pneg %p134
        %p260 = pneg %p131
        %s261 = sand.u32 %s121, 1
        %s262 = scalar_lea.sflag [#allocation4], %s261
        %s263 = sand.u32 %s121, 1
        %s264 = smul.addr %s263, 512
        %s265 = scalar_lea.vmem [#allocation8], %s264
        %s266 = smul.u32 32, %s25
        %s267 = smul.u32 4, %s26
        %s268 = smul.u32 4, %s26
        %s269 = smul.u32 32, %s25
        %s270 = smul.u32 4, %s26
        %v271 = vld [vmem:[#allocation2] sm:$0xf]
        %v272 = vld [vmem:[#allocation2 + $0x4] sm:$0xf]
        %v273 = vld [vmem:[#allocation2 + $0x8] sm:$0xf]
        %v274 = vld [vmem:[#allocation2 + $0xc] sm:$0xf]
        %v275 = vld [vmem:[#allocation2 + $0x10] sm:$0xf]
        %v276 = vld [vmem:[#allocation2 + $0x14] sm:$0xf]
        %v277 = vld [vmem:[#allocation2 + $0x18] sm:$0xf]
        %v278 = vld [vmem:[#allocation2 + $0x1c] sm:$0xf]
        %v279 = vld [vmem:[#allocation2 + $0x20] sm:$0xf]
        %v280 = vld [vmem:[#allocation2 + $0x24] sm:$0xf]
        %v281 = vld [vmem:[#allocation2 + $0x28] sm:$0xf]
        %v282 = vld [vmem:[#allocation2 + $0x2c] sm:$0xf]
        %v283 = vld [vmem:[#allocation2 + $0x30] sm:$0xf]
        %v284 = vld [vmem:[#allocation2 + $0x34] sm:$0xf]
        %v285 = vld [vmem:[#allocation2 + $0x38] sm:$0xf]
        %v286 = vld [vmem:[#allocation2 + $0x3c] sm:$0xf]
        %v287 = vld [vmem:[#allocation2 + $0x40] sm:$0xf]
        %v288 = vld [vmem:[#allocation2 + $0x44] sm:$0xf]
        %v289 = vld [vmem:[#allocation2 + $0x48] sm:$0xf]
        %v290 = vld [vmem:[#allocation2 + $0x4c] sm:$0xf]
        %v291 = vld [vmem:[#allocation2 + $0x50] sm:$0xf]
        %v292 = vld [vmem:[#allocation2 + $0x54] sm:$0xf]
        %v293 = vld [vmem:[#allocation2 + $0x58] sm:$0xf]
        %v294 = vld [vmem:[#allocation2 + $0x5c] sm:$0xf]
        %v295 = vld [vmem:[#allocation2 + $0x60] sm:$0xf]
        %v296 = vld [vmem:[#allocation2 + $0x64] sm:$0xf]
        %v297 = vld [vmem:[#allocation2 + $0x68] sm:$0xf]
        %v298 = vld [vmem:[#allocation2 + $0x6c] sm:$0xf]
        %v299 = vld [vmem:[#allocation2 + $0x70] sm:$0xf]
        %v300 = vld [vmem:[#allocation2 + $0x74] sm:$0xf]
        %v301 = vld [vmem:[#allocation2 + $0x78] sm:$0xf]
        %v302 = vld [vmem:[#allocation2 + $0x7c] sm:$0xf]
        %v303 = vld [vmem:[%s227] sm:$0xff]
        %v304 = vld [vmem:[%s227 + $0x8] sm:$0xff]
        %v305 = vld [vmem:[%s227 + $0x10] sm:$0xff]
        %v306 = vld [vmem:[%s227 + $0x18] sm:$0xff]
        %v307 = vld [vmem:[%s227 + $0x20] sm:$0xff]
        %v308 = vld [vmem:[%s227 + $0x28] sm:$0xff]
        %v309 = vld [vmem:[%s227 + $0x30] sm:$0xff]
        %v310 = vld [vmem:[%s227 + $0x38] sm:$0xff]
        %v311 = vld [vmem:[%s227 + $0x40] sm:$0xff]
        %v312 = vld [vmem:[%s227 + $0x48] sm:$0xff]
        %v313 = vld [vmem:[%s227 + $0x50] sm:$0xff]
        %v314 = vld [vmem:[%s227 + $0x58] sm:$0xff]
        %v315 = vld [vmem:[%s227 + $0x60] sm:$0xff]
        %v316 = vld [vmem:[%s227 + $0x68] sm:$0xff]
        %v317 = vld [vmem:[%s227 + $0x70] sm:$0xff]
        %v318 = vld [vmem:[%s227 + $0x78] sm:$0xff]
        %v319 = vld [vmem:[%s227 + $0x80] sm:$0xff]
        %v320 = vld [vmem:[%s227 + $0x88] sm:$0xff]
        %v321 = vld [vmem:[%s227 + $0x90] sm:$0xff]
        %v322 = vld [vmem:[%s227 + $0x98] sm:$0xff]
        %v323 = vld [vmem:[%s227 + $0xa0] sm:$0xff]
        %v324 = vld [vmem:[%s227 + $0xa8] sm:$0xff]
        %v325 = vld [vmem:[%s227 + $0xb0] sm:$0xff]
        %v326 = vld [vmem:[%s227 + $0xb8] sm:$0xff]
        %v327 = vld [vmem:[%s227 + $0xc0] sm:$0xff]
        %v328 = vld [vmem:[%s227 + $0xc8] sm:$0xff]
        %v329 = vld [vmem:[%s227 + $0xd0] sm:$0xff]
        %v330 = vld [vmem:[%s227 + $0xd8] sm:$0xff]
        %v331 = vld [vmem:[%s227 + $0xe0] sm:$0xff]
        %v332 = vld [vmem:[%s227 + $0xe8] sm:$0xff]
        %v333 = vld [vmem:[%s227 + $0xf0] sm:$0xff]
        %v334 = vld [vmem:[%s227 + $0xf8] sm:$0xff]
        %v335 = vld [vmem:[%s237] sm:$0xf]
        %v337 = vperm.slane %v335, 0
        %v338 = vperm.slane %v335, 1
        %v339 = vperm.slane %v335, 2
        %v340 = vperm.slane %v335, 3
        %v377 = vunpack.c.l.b16 %v271
        %v378 = vunpack.c.l.b16 %v272
        %v379 = vunpack.c.l.b16 %v273
        %v380 = vunpack.c.l.b16 %v274
        %v381 = vunpack.c.l.b16 %v275
        %v382 = vunpack.c.l.b16 %v276
        %v383 = vunpack.c.l.b16 %v277
        %v384 = vunpack.c.l.b16 %v278
        %v385 = vunpack.c.l.b16 %v279
        %v386 = vunpack.c.l.b16 %v280
        %v387 = vunpack.c.l.b16 %v281
        %v388 = vunpack.c.l.b16 %v282
        %v389 = vunpack.c.l.b16 %v283
        %v390 = vunpack.c.l.b16 %v284
        %v391 = vunpack.c.l.b16 %v285
        %v392 = vunpack.c.l.b16 %v286
        %v393 = vunpack.c.l.b16 %v287
        %v394 = vunpack.c.l.b16 %v288
        %v395 = vunpack.c.l.b16 %v289
        %v396 = vunpack.c.l.b16 %v290
        %v397 = vunpack.c.l.b16 %v291
        %v398 = vunpack.c.l.b16 %v292
        %v399 = vunpack.c.l.b16 %v293
        %v400 = vunpack.c.l.b16 %v294
        %v401 = vunpack.c.l.b16 %v295
        %v402 = vunpack.c.l.b16 %v296
        %v403 = vunpack.c.l.b16 %v297
        %v404 = vunpack.c.l.b16 %v298
        %v405 = vunpack.c.l.b16 %v299
        %v406 = vunpack.c.l.b16 %v300
        %v407 = vunpack.c.l.b16 %v301
        %v408 = vunpack.c.l.b16 %v302
        %v409 = vpack.c.b16 %v378, %v377
        %v410 = vpack.c.b16 %v380, %v379
        %v411 = vpack.c.b16 %v382, %v381
        %v412 = vpack.c.b16 %v384, %v383
        %v413 = vpack.c.b16 %v386, %v385
        %v414 = vpack.c.b16 %v388, %v387
        %v415 = vpack.c.b16 %v390, %v389
        %v416 = vpack.c.b16 %v392, %v391
        %v417 = vpack.c.b16 %v394, %v393
        %v418 = vpack.c.b16 %v396, %v395
        %v419 = vpack.c.b16 %v398, %v397
        %v420 = vpack.c.b16 %v400, %v399
        %v421 = vpack.c.b16 %v402, %v401
        %v422 = vpack.c.b16 %v404, %v403
        %v423 = vpack.c.b16 %v406, %v405
        %v424 = vpack.c.b16 %v408, %v407
        %v473 = vunpack.c.l.b16 %v303
        %v474 = vunpack.c.h.b16 %v303
        %v475 = vunpack.c.l.b16 %v304
        %v476 = vunpack.c.h.b16 %v304
        %v477 = vunpack.c.l.b16 %v305
        %v478 = vunpack.c.h.b16 %v305
        %v479 = vunpack.c.l.b16 %v306
        %v480 = vunpack.c.h.b16 %v306
        %v481 = vunpack.c.l.b16 %v307
        %v482 = vunpack.c.h.b16 %v307
        %v483 = vunpack.c.l.b16 %v308
        %v484 = vunpack.c.h.b16 %v308
        %v485 = vunpack.c.l.b16 %v309
        %v486 = vunpack.c.h.b16 %v309
        %v487 = vunpack.c.l.b16 %v310
        %v488 = vunpack.c.h.b16 %v310
        %v489 = vunpack.c.l.b16 %v311
        %v490 = vunpack.c.h.b16 %v311
        %v491 = vunpack.c.l.b16 %v312
        %v492 = vunpack.c.h.b16 %v312
        %v493 = vunpack.c.l.b16 %v313
        %v494 = vunpack.c.h.b16 %v313
        %v495 = vunpack.c.l.b16 %v314
        %v496 = vunpack.c.h.b16 %v314
        %v497 = vunpack.c.l.b16 %v315
        %v498 = vunpack.c.h.b16 %v315
        %v499 = vunpack.c.l.b16 %v316
        %v500 = vunpack.c.h.b16 %v316
        %v501 = vunpack.c.l.b16 %v317
        %v502 = vunpack.c.h.b16 %v317
        %v503 = vunpack.c.l.b16 %v318
        %v504 = vunpack.c.h.b16 %v318
        %v505 = vunpack.c.l.b16 %v319
        %v506 = vunpack.c.h.b16 %v319
        %v507 = vunpack.c.l.b16 %v320
        %v508 = vunpack.c.h.b16 %v320
        %v509 = vunpack.c.l.b16 %v321
        %v510 = vunpack.c.h.b16 %v321
        %v511 = vunpack.c.l.b16 %v322
        %v512 = vunpack.c.h.b16 %v322
        %v513 = vunpack.c.l.b16 %v323
        %v514 = vunpack.c.h.b16 %v323
        %v515 = vunpack.c.l.b16 %v324
        %v516 = vunpack.c.h.b16 %v324
        %v517 = vunpack.c.l.b16 %v325
        %v518 = vunpack.c.h.b16 %v325
        %v519 = vunpack.c.l.b16 %v326
        %v520 = vunpack.c.h.b16 %v326
        %v521 = vunpack.c.l.b16 %v327
        %v522 = vunpack.c.h.b16 %v327
        %v523 = vunpack.c.l.b16 %v328
        %v524 = vunpack.c.h.b16 %v328
        %v525 = vunpack.c.l.b16 %v329
        %v526 = vunpack.c.h.b16 %v329
        %v527 = vunpack.c.l.b16 %v330
        %v528 = vunpack.c.h.b16 %v330
        %v529 = vunpack.c.l.b16 %v331
        %v530 = vunpack.c.h.b16 %v331
        %v531 = vunpack.c.l.b16 %v332
        %v532 = vunpack.c.h.b16 %v332
        %v533 = vunpack.c.l.b16 %v333
        %v534 = vunpack.c.h.b16 %v333
        %v535 = vunpack.c.l.b16 %v334
        %v536 = vunpack.c.h.b16 %v334
        %v537 = vpack.c.b16 %v477, %v473
        %v538 = vpack.c.b16 %v478, %v474
        %v539 = vpack.c.b16 %v479, %v475
        %v540 = vpack.c.b16 %v480, %v476
        %v541 = vpack.c.b16 %v485, %v481
        %v542 = vpack.c.b16 %v486, %v482
        %v543 = vpack.c.b16 %v487, %v483
        %v544 = vpack.c.b16 %v488, %v484
        %v545 = vpack.c.b16 %v493, %v489
        %v546 = vpack.c.b16 %v494, %v490
        %v547 = vpack.c.b16 %v495, %v491
        %v548 = vpack.c.b16 %v496, %v492
        %v549 = vpack.c.b16 %v501, %v497
        %v550 = vpack.c.b16 %v502, %v498
        %v551 = vpack.c.b16 %v503, %v499
        %v552 = vpack.c.b16 %v504, %v500
        %v553 = vpack.c.b16 %v509, %v505
        %v554 = vpack.c.b16 %v510, %v506
        %v555 = vpack.c.b16 %v511, %v507
        %v556 = vpack.c.b16 %v512, %v508
        %v557 = vpack.c.b16 %v517, %v513
        %v558 = vpack.c.b16 %v518, %v514
        %v559 = vpack.c.b16 %v519, %v515
        %v560 = vpack.c.b16 %v520, %v516
        %v561 = vpack.c.b16 %v525, %v521
        %v562 = vpack.c.b16 %v526, %v522
        %v563 = vpack.c.b16 %v527, %v523
        %v564 = vpack.c.b16 %v528, %v524
        %v565 = vpack.c.b16 %v533, %v529
        %v566 = vpack.c.b16 %v534, %v530
        %v567 = vpack.c.b16 %v535, %v531
        %v568 = vpack.c.b16 %v536, %v532
        %601 = vmatpush.bf16.msra.mxu0 %v565
        %602 = vmatpush.bf16.msra.mxu0 %v561
        %603 = vmatpush.bf16.msra.mxu0 %v557
        %604 = vmatpush.bf16.msra.mxu0 %v553
        %605 = vmatpush.bf16.msra.mxu0 %v549
        %606 = vmatpush.bf16.msra.mxu0 %v545
        %607 = vmatpush.bf16.msra.mxu0 %v541
        %608 = vmatpush.bf16.msra.mxu0 %v537
        %609 = vmatmul.bf16.gmra.mxu0 %v409
        %v610 = vpop.f32.mrf.mxu0
        %v611 = vadd.f32 %v337, %v610
        %v612 = vpop.f32.mrf.mxu0
        %v613 = vadd.f32 %v337, %v612
        %614 = vmatmul.bf16.gmra.mxu0 %v410
        %v615 = vpop.f32.mrf.mxu0
        %v616 = vadd.f32 %v337, %v615
        %v617 = vpop.f32.mrf.mxu0
        %v618 = vadd.f32 %v337, %v617
        %619 = vmatmul.bf16.gmra.mxu0 %v411
        %v620 = vpop.f32.mrf.mxu0
        %v621 = vadd.f32 %v337, %v620
        %v622 = vpop.f32.mrf.mxu0
        %v623 = vadd.f32 %v337, %v622
        %624 = vmatmul.bf16.gmra.mxu0 %v412
        %v625 = vpop.f32.mrf.mxu0
        %v626 = vadd.f32 %v337, %v625
        %v627 = vpop.f32.mrf.mxu0
        %v628 = vadd.f32 %v337, %v627
        %629 = vmatmul.bf16.gmra.mxu0 %v413
        %v630 = vpop.f32.mrf.mxu0
        %v631 = vadd.f32 %v337, %v630
        %v632 = vpop.f32.mrf.mxu0
        %v633 = vadd.f32 %v337, %v632
        %634 = vmatmul.bf16.gmra.mxu0 %v414
        %v635 = vpop.f32.mrf.mxu0
        %v636 = vadd.f32 %v337, %v635
        %v637 = vpop.f32.mrf.mxu0
        %v638 = vadd.f32 %v337, %v637
        %639 = vmatmul.bf16.gmra.mxu0 %v415
        %v640 = vpop.f32.mrf.mxu0
        %v641 = vadd.f32 %v337, %v640
        %v642 = vpop.f32.mrf.mxu0
        %v643 = vadd.f32 %v337, %v642
        %644 = vmatmul.bf16.gmra.mxu0 %v416
        %v645 = vpop.f32.mrf.mxu0
        %v646 = vadd.f32 %v337, %v645
        %v647 = vpop.f32.mrf.mxu0
        %v648 = vadd.f32 %v337, %v647
        %649 = vmatmul.bf16.gmra.mxu0 %v417
        %v650 = vpop.f32.mrf.mxu0
        %v651 = vadd.f32 %v337, %v650
        %v652 = vpop.f32.mrf.mxu0
        %v653 = vadd.f32 %v337, %v652
        %654 = vmatmul.bf16.gmra.mxu0 %v418
        %v655 = vpop.f32.mrf.mxu0
        %v656 = vadd.f32 %v337, %v655
        %v657 = vpop.f32.mrf.mxu0
        %v658 = vadd.f32 %v337, %v657
        %659 = vmatmul.bf16.gmra.mxu0 %v419
        %v660 = vpop.f32.mrf.mxu0
        %v661 = vadd.f32 %v337, %v660
        %v662 = vpop.f32.mrf.mxu0
        %v663 = vadd.f32 %v337, %v662
        %664 = vmatmul.bf16.gmra.mxu0 %v420
        %v665 = vpop.f32.mrf.mxu0
        %v666 = vadd.f32 %v337, %v665
        %v667 = vpop.f32.mrf.mxu0
        %v668 = vadd.f32 %v337, %v667
        %669 = vmatmul.bf16.gmra.mxu0 %v421
        %v670 = vpop.f32.mrf.mxu0
        %v671 = vadd.f32 %v337, %v670
        %v672 = vpop.f32.mrf.mxu0
        %v673 = vadd.f32 %v337, %v672
        %674 = vmatmul.bf16.gmra.mxu0 %v422
        %v675 = vpop.f32.mrf.mxu0
        %v676 = vadd.f32 %v337, %v675
        %v677 = vpop.f32.mrf.mxu0
        %v678 = vadd.f32 %v337, %v677
        %679 = vmatmul.bf16.gmra.mxu0 %v423
        %v680 = vpop.f32.mrf.mxu0
        %v681 = vadd.f32 %v337, %v680
        %v682 = vpop.f32.mrf.mxu0
        %v683 = vadd.f32 %v337, %v682
        %684 = vmatmul.bf16.gmra.mxu0 %v424
        %v685 = vpop.f32.mrf.mxu0
        %v686 = vadd.f32 %v337, %v685
        %v687 = vpop.f32.mrf.mxu0
        %v688 = vadd.f32 %v337, %v687
        %689 = vdwg.mxu0
        %690 = vmatpush.bf16.msra.mxu0 %v566
        %691 = vmatpush.bf16.msra.mxu0 %v562
        %692 = vmatpush.bf16.msra.mxu0 %v558
        %693 = vmatpush.bf16.msra.mxu0 %v554
        %694 = vmatpush.bf16.msra.mxu0 %v550
        %695 = vmatpush.bf16.msra.mxu0 %v546
        %696 = vmatpush.bf16.msra.mxu0 %v542
        %697 = vmatpush.bf16.msra.mxu0 %v538
        %698 = vmatmul.bf16.gmra.mxu0 %v409
        %v699 = vpop.f32.mrf.mxu0
        %v700 = vadd.f32 %v338, %v699
        %v701 = vpop.f32.mrf.mxu0
        %v702 = vadd.f32 %v338, %v701
        %703 = vmatmul.bf16.gmra.mxu0 %v410
        %v704 = vpop.f32.mrf.mxu0
        %v705 = vadd.f32 %v338, %v704
        %v706 = vpop.f32.mrf.mxu0
        %v707 = vadd.f32 %v338, %v706
        %708 = vmatmul.bf16.gmra.mxu0 %v411
        %v709 = vpop.f32.mrf.mxu0
        %v710 = vadd.f32 %v338, %v709
        %v711 = vpop.f32.mrf.mxu0
        %v712 = vadd.f32 %v338, %v711
        %713 = vmatmul.bf16.gmra.mxu0 %v412
        %v714 = vpop.f32.mrf.mxu0
        %v715 = vadd.f32 %v338, %v714
        %v716 = vpop.f32.mrf.mxu0
        %v717 = vadd.f32 %v338, %v716
        %718 = vmatmul.bf16.gmra.mxu0 %v413
        %v719 = vpop.f32.mrf.mxu0
        %v720 = vadd.f32 %v338, %v719
        %v721 = vpop.f32.mrf.mxu0
        %v722 = vadd.f32 %v338, %v721
        %723 = vmatmul.bf16.gmra.mxu0 %v414
        %v724 = vpop.f32.mrf.mxu0
        %v725 = vadd.f32 %v338, %v724
        %v726 = vpop.f32.mrf.mxu0
        %v727 = vadd.f32 %v338, %v726
        %728 = vmatmul.bf16.gmra.mxu0 %v415
        %v729 = vpop.f32.mrf.mxu0
        %v730 = vadd.f32 %v338, %v729
        %v731 = vpop.f32.mrf.mxu0
        %v732 = vadd.f32 %v338, %v731
        %733 = vmatmul.bf16.gmra.mxu0 %v416
        %v734 = vpop.f32.mrf.mxu0
        %v735 = vadd.f32 %v338, %v734
        %v736 = vpop.f32.mrf.mxu0
        %v737 = vadd.f32 %v338, %v736
        %738 = vmatmul.bf16.gmra.mxu0 %v417
        %v739 = vpop.f32.mrf.mxu0
        %v740 = vadd.f32 %v338, %v739
        %v741 = vpop.f32.mrf.mxu0
        %v742 = vadd.f32 %v338, %v741
        %743 = vmatmul.bf16.gmra.mxu0 %v418
        %v744 = vpop.f32.mrf.mxu0
        %v745 = vadd.f32 %v338, %v744
        %v746 = vpop.f32.mrf.mxu0
        %v747 = vadd.f32 %v338, %v746
        %748 = vmatmul.bf16.gmra.mxu0 %v419
        %v749 = vpop.f32.mrf.mxu0
        %v750 = vadd.f32 %v338, %v749
        %v751 = vpop.f32.mrf.mxu0
        %v752 = vadd.f32 %v338, %v751
        %753 = vmatmul.bf16.gmra.mxu0 %v420
        %v754 = vpop.f32.mrf.mxu0
        %v755 = vadd.f32 %v338, %v754
        %v756 = vpop.f32.mrf.mxu0
        %v757 = vadd.f32 %v338, %v756
        %758 = vmatmul.bf16.gmra.mxu0 %v421
        %v759 = vpop.f32.mrf.mxu0
        %v760 = vadd.f32 %v338, %v759
        %v761 = vpop.f32.mrf.mxu0
        %v762 = vadd.f32 %v338, %v761
        %763 = vmatmul.bf16.gmra.mxu0 %v422
        %v764 = vpop.f32.mrf.mxu0
        %v765 = vadd.f32 %v338, %v764
        %v766 = vpop.f32.mrf.mxu0
        %v767 = vadd.f32 %v338, %v766
        %768 = vmatmul.bf16.gmra.mxu0 %v423
        %v769 = vpop.f32.mrf.mxu0
        %v770 = vadd.f32 %v338, %v769
        %v771 = vpop.f32.mrf.mxu0
        %v772 = vadd.f32 %v338, %v771
        %773 = vmatmul.bf16.gmra.mxu0 %v424
        %v774 = vpop.f32.mrf.mxu0
        %v775 = vadd.f32 %v338, %v774
        %v776 = vpop.f32.mrf.mxu0
        %v777 = vadd.f32 %v338, %v776
        %778 = vdwg.mxu0
        %779 = vmatpush.bf16.msra.mxu0 %v567
        %780 = vmatpush.bf16.msra.mxu0 %v563
        %781 = vmatpush.bf16.msra.mxu0 %v559
        %782 = vmatpush.bf16.msra.mxu0 %v555
        %783 = vmatpush.bf16.msra.mxu0 %v551
        %784 = vmatpush.bf16.msra.mxu0 %v547
        %785 = vmatpush.bf16.msra.mxu0 %v543
        %786 = vmatpush.bf16.msra.mxu0 %v539
        %787 = vmatmul.bf16.gmra.mxu0 %v409
        %v788 = vpop.f32.mrf.mxu0
        %v789 = vadd.f32 %v339, %v788
        %v790 = vpop.f32.mrf.mxu0
        %v791 = vadd.f32 %v339, %v790
        %792 = vmatmul.bf16.gmra.mxu0 %v410
        %v793 = vpop.f32.mrf.mxu0
        %v794 = vadd.f32 %v339, %v793
        %v795 = vpop.f32.mrf.mxu0
        %v796 = vadd.f32 %v339, %v795
        %797 = vmatmul.bf16.gmra.mxu0 %v411
        %v798 = vpop.f32.mrf.mxu0
        %v799 = vadd.f32 %v339, %v798
        %v800 = vpop.f32.mrf.mxu0
        %v801 = vadd.f32 %v339, %v800
        %802 = vmatmul.bf16.gmra.mxu0 %v412
        %v803 = vpop.f32.mrf.mxu0
        %v804 = vadd.f32 %v339, %v803
        %v805 = vpop.f32.mrf.mxu0
        %v806 = vadd.f32 %v339, %v805
        %807 = vmatmul.bf16.gmra.mxu0 %v413
        %v808 = vpop.f32.mrf.mxu0
        %v809 = vadd.f32 %v339, %v808
        %v810 = vpop.f32.mrf.mxu0
        %v811 = vadd.f32 %v339, %v810
        %812 = vmatmul.bf16.gmra.mxu0 %v414
        %v813 = vpop.f32.mrf.mxu0
        %v814 = vadd.f32 %v339, %v813
        %v815 = vpop.f32.mrf.mxu0
        %v816 = vadd.f32 %v339, %v815
        %817 = vmatmul.bf16.gmra.mxu0 %v415
        %v818 = vpop.f32.mrf.mxu0
        %v819 = vadd.f32 %v339, %v818
        %v820 = vpop.f32.mrf.mxu0
        %v821 = vadd.f32 %v339, %v820
        %822 = vmatmul.bf16.gmra.mxu0 %v416
        %v823 = vpop.f32.mrf.mxu0
        %v824 = vadd.f32 %v339, %v823
        %v825 = vpop.f32.mrf.mxu0
        %v826 = vadd.f32 %v339, %v825
        %827 = vmatmul.bf16.gmra.mxu0 %v417
        %v828 = vpop.f32.mrf.mxu0
        %v829 = vadd.f32 %v339, %v828
        %v830 = vpop.f32.mrf.mxu0
        %v831 = vadd.f32 %v339, %v830
        %832 = vmatmul.bf16.gmra.mxu0 %v418
        %v833 = vpop.f32.mrf.mxu0
        %v834 = vadd.f32 %v339, %v833
        %v835 = vpop.f32.mrf.mxu0
        %v836 = vadd.f32 %v339, %v835
        %837 = vmatmul.bf16.gmra.mxu0 %v419
        %v838 = vpop.f32.mrf.mxu0
        %v839 = vadd.f32 %v339, %v838
        %v840 = vpop.f32.mrf.mxu0
        %v841 = vadd.f32 %v339, %v840
        %842 = vmatmul.bf16.gmra.mxu0 %v420
        %v843 = vpop.f32.mrf.mxu0
        %v844 = vadd.f32 %v339, %v843
        %v845 = vpop.f32.mrf.mxu0
        %v846 = vadd.f32 %v339, %v845
        %847 = vmatmul.bf16.gmra.mxu0 %v421
        %v848 = vpop.f32.mrf.mxu0
        %v849 = vadd.f32 %v339, %v848
        %v850 = vpop.f32.mrf.mxu0
        %v851 = vadd.f32 %v339, %v850
        %852 = vmatmul.bf16.gmra.mxu0 %v422
        %v853 = vpop.f32.mrf.mxu0
        %v854 = vadd.f32 %v339, %v853
        %v855 = vpop.f32.mrf.mxu0
        %v856 = vadd.f32 %v339, %v855
        %857 = vmatmul.bf16.gmra.mxu0 %v423
        %v858 = vpop.f32.mrf.mxu0
        %v859 = vadd.f32 %v339, %v858
        %v860 = vpop.f32.mrf.mxu0
        %v861 = vadd.f32 %v339, %v860
        %862 = vmatmul.bf16.gmra.mxu0 %v424
        %v863 = vpop.f32.mrf.mxu0
        %v864 = vadd.f32 %v339, %v863
        %v865 = vpop.f32.mrf.mxu0
        %v866 = vadd.f32 %v339, %v865
        %867 = vdwg.mxu0
        %868 = vmatpush.bf16.msra.mxu0 %v568
        %869 = vmatpush.bf16.msra.mxu0 %v564
        %870 = vmatpush.bf16.msra.mxu0 %v560
        %871 = vmatpush.bf16.msra.mxu0 %v556
        %872 = vmatpush.bf16.msra.mxu0 %v552
        %873 = vmatpush.bf16.msra.mxu0 %v548
        %874 = vmatpush.bf16.msra.mxu0 %v544
        %875 = vmatpush.bf16.msra.mxu0 %v540
        %876 = vmatmul.bf16.gmra.mxu0 %v409
        %v877 = vpop.f32.mrf.mxu0
        %v878 = vadd.f32 %v340, %v877
        %v879 = vpop.f32.mrf.mxu0
        %v880 = vadd.f32 %v340, %v879
        %881 = vmatmul.bf16.gmra.mxu0 %v410
        %v882 = vpop.f32.mrf.mxu0
        %v883 = vadd.f32 %v340, %v882
        %v884 = vpop.f32.mrf.mxu0
        %v885 = vadd.f32 %v340, %v884
        %886 = vmatmul.bf16.gmra.mxu0 %v411
        %v887 = vpop.f32.mrf.mxu0
        %v888 = vadd.f32 %v340, %v887
        %v889 = vpop.f32.mrf.mxu0
        %v890 = vadd.f32 %v340, %v889
        %891 = vmatmul.bf16.gmra.mxu0 %v412
        %v892 = vpop.f32.mrf.mxu0
        %v893 = vadd.f32 %v340, %v892
        %v894 = vpop.f32.mrf.mxu0
        %v895 = vadd.f32 %v340, %v894
        %896 = vmatmul.bf16.gmra.mxu0 %v413
        %v897 = vpop.f32.mrf.mxu0
        %v898 = vadd.f32 %v340, %v897
        %v899 = vpop.f32.mrf.mxu0
        %v900 = vadd.f32 %v340, %v899
        %901 = vmatmul.bf16.gmra.mxu0 %v414
        %v902 = vpop.f32.mrf.mxu0
        %v903 = vadd.f32 %v340, %v902
        %v904 = vpop.f32.mrf.mxu0
        %v905 = vadd.f32 %v340, %v904
        %906 = vmatmul.bf16.gmra.mxu0 %v415
        %v907 = vpop.f32.mrf.mxu0
        %v908 = vadd.f32 %v340, %v907
        %v909 = vpop.f32.mrf.mxu0
        %v910 = vadd.f32 %v340, %v909
        %911 = vmatmul.bf16.gmra.mxu0 %v416
        %v912 = vpop.f32.mrf.mxu0
        %v913 = vadd.f32 %v340, %v912
        %v914 = vpop.f32.mrf.mxu0
        %v915 = vadd.f32 %v340, %v914
        %916 = vmatmul.bf16.gmra.mxu0 %v417
        %v917 = vpop.f32.mrf.mxu0
        %v918 = vadd.f32 %v340, %v917
        %v919 = vpop.f32.mrf.mxu0
        %v920 = vadd.f32 %v340, %v919
        %921 = vmatmul.bf16.gmra.mxu0 %v418
        %v922 = vpop.f32.mrf.mxu0
        %v923 = vadd.f32 %v340, %v922
        %v924 = vpop.f32.mrf.mxu0
        %v925 = vadd.f32 %v340, %v924
        %926 = vmatmul.bf16.gmra.mxu0 %v419
        %v927 = vpop.f32.mrf.mxu0
        %v928 = vadd.f32 %v340, %v927
        %v929 = vpop.f32.mrf.mxu0
        %v930 = vadd.f32 %v340, %v929
        %931 = vmatmul.bf16.gmra.mxu0 %v420
        %v932 = vpop.f32.mrf.mxu0
        %v933 = vadd.f32 %v340, %v932
        %v934 = vpop.f32.mrf.mxu0
        %v935 = vadd.f32 %v340, %v934
        %936 = vmatmul.bf16.gmra.mxu0 %v421
        %v937 = vpop.f32.mrf.mxu0
        %v938 = vadd.f32 %v340, %v937
        %v939 = vpop.f32.mrf.mxu0
        %v940 = vadd.f32 %v340, %v939
        %941 = vmatmul.bf16.gmra.mxu0 %v422
        %v942 = vpop.f32.mrf.mxu0
        %v943 = vadd.f32 %v340, %v942
        %v944 = vpop.f32.mrf.mxu0
        %v945 = vadd.f32 %v340, %v944
        %946 = vmatmul.bf16.gmra.mxu0 %v423
        %v947 = vpop.f32.mrf.mxu0
        %v948 = vadd.f32 %v340, %v947
        %v949 = vpop.f32.mrf.mxu0
        %v950 = vadd.f32 %v340, %v949
        %951 = vmatmul.bf16.gmra.mxu0 %v424
        %v952 = vpop.f32.mrf.mxu0
        %v953 = vadd.f32 %v340, %v952
        %v954 = vpop.f32.mrf.mxu0
        %v955 = vadd.f32 %v340, %v954
        %956 = vdwg.mxu0
        %v957 = vpack.c.bf16 %v700, %v611
        %v958 = vpack.c.bf16 %v878, %v789
        %v959 = vpack.c.bf16 %v702, %v613
        %v960 = vpack.c.bf16 %v880, %v791
        %v961 = vpack.c.bf16 %v705, %v616
        %v962 = vpack.c.bf16 %v883, %v794
        %v963 = vpack.c.bf16 %v707, %v618
        %v964 = vpack.c.bf16 %v885, %v796
        %v965 = vpack.c.bf16 %v710, %v621
        %v966 = vpack.c.bf16 %v888, %v799
        %v967 = vpack.c.bf16 %v712, %v623
        %v968 = vpack.c.bf16 %v890, %v801
        %v969 = vpack.c.bf16 %v715, %v626
        %v970 = vpack.c.bf16 %v893, %v804
        %v971 = vpack.c.bf16 %v717, %v628
        %v972 = vpack.c.bf16 %v895, %v806
        %v973 = vpack.c.bf16 %v720, %v631
        %v974 = vpack.c.bf16 %v898, %v809
        %v975 = vpack.c.bf16 %v722, %v633
        %v976 = vpack.c.bf16 %v900, %v811
        %v977 = vpack.c.bf16 %v725, %v636
        %v978 = vpack.c.bf16 %v903, %v814
        %v979 = vpack.c.bf16 %v727, %v638
        %v980 = vpack.c.bf16 %v905, %v816
        %v981 = vpack.c.bf16 %v730, %v641
        %v982 = vpack.c.bf16 %v908, %v819
        %v983 = vpack.c.bf16 %v732, %v643
        %v984 = vpack.c.bf16 %v910, %v821
        %v985 = vpack.c.bf16 %v735, %v646
        %v986 = vpack.c.bf16 %v913, %v824
        %v987 = vpack.c.bf16 %v737, %v648
        %v988 = vpack.c.bf16 %v915, %v826
        %v989 = vpack.c.bf16 %v740, %v651
        %v990 = vpack.c.bf16 %v918, %v829
        %v991 = vpack.c.bf16 %v742, %v653
        %v992 = vpack.c.bf16 %v920, %v831
        %v993 = vpack.c.bf16 %v745, %v656
        %v994 = vpack.c.bf16 %v923, %v834
        %v995 = vpack.c.bf16 %v747, %v658
        %v996 = vpack.c.bf16 %v925, %v836
        %v997 = vpack.c.bf16 %v750, %v661
        %v998 = vpack.c.bf16 %v928, %v839
        %v999 = vpack.c.bf16 %v752, %v663
        %v1000 = vpack.c.bf16 %v930, %v841
        %v1001 = vpack.c.bf16 %v755, %v666
        %v1002 = vpack.c.bf16 %v933, %v844
        %v1003 = vpack.c.bf16 %v757, %v668
        %v1004 = vpack.c.bf16 %v935, %v846
        %v1005 = vpack.c.bf16 %v760, %v671
        %v1006 = vpack.c.bf16 %v938, %v849
        %v1007 = vpack.c.bf16 %v762, %v673
        %v1008 = vpack.c.bf16 %v940, %v851
        %v1009 = vpack.c.bf16 %v765, %v676
        %v1010 = vpack.c.bf16 %v943, %v854
        %v1011 = vpack.c.bf16 %v767, %v678
        %v1012 = vpack.c.bf16 %v945, %v856
        %v1013 = vpack.c.bf16 %v770, %v681
        %v1014 = vpack.c.bf16 %v948, %v859
        %v1015 = vpack.c.bf16 %v772, %v683
        %v1016 = vpack.c.bf16 %v950, %v861
        %v1017 = vpack.c.bf16 %v775, %v686
        %v1018 = vpack.c.bf16 %v953, %v864
        %v1019 = vpack.c.bf16 %v777, %v688
        %v1020 = vpack.c.bf16 %v955, %v866
        %1021 = vst [vmem:[%s265] sm:$0xff] %v957
        %1022 = vst [vmem:[%s265 + $0x8] sm:$0xff] %v958
        %1023 = vst [vmem:[%s265 + $0x10] sm:$0xff] %v959
        %1024 = vst [vmem:[%s265 + $0x18] sm:$0xff] %v960
        %1025 = vst [vmem:[%s265 + $0x20] sm:$0xff] %v961
        %1026 = vst [vmem:[%s265 + $0x28] sm:$0xff] %v962
        %1027 = vst [vmem:[%s265 + $0x30] sm:$0xff] %v963
        %1028 = vst [vmem:[%s265 + $0x38] sm:$0xff] %v964
        %1029 = vst [vmem:[%s265 + $0x40] sm:$0xff] %v965
        %1030 = vst [vmem:[%s265 + $0x48] sm:$0xff] %v966
        %1031 = vst [vmem:[%s265 + $0x50] sm:$0xff] %v967
        %1032 = vst [vmem:[%s265 + $0x58] sm:$0xff] %v968
        %1033 = vst [vmem:[%s265 + $0x60] sm:$0xff] %v969
        %1034 = vst [vmem:[%s265 + $0x68] sm:$0xff] %v970
        %1035 = vst [vmem:[%s265 + $0x70] sm:$0xff] %v971
        %1036 = vst [vmem:[%s265 + $0x78] sm:$0xff] %v972
        %1037 = vst [vmem:[%s265 + $0x80] sm:$0xff] %v973
        %1038 = vst [vmem:[%s265 + $0x88] sm:$0xff] %v974
        %1039 = vst [vmem:[%s265 + $0x90] sm:$0xff] %v975
        %1040 = vst [vmem:[%s265 + $0x98] sm:$0xff] %v976
        %1041 = vst [vmem:[%s265 + $0xa0] sm:$0xff] %v977
        %1042 = vst [vmem:[%s265 + $0xa8] sm:$0xff] %v978
        %1043 = vst [vmem:[%s265 + $0xb0] sm:$0xff] %v979
        %1044 = vst [vmem:[%s265 + $0xb8] sm:$0xff] %v980
        %1045 = vst [vmem:[%s265 + $0xc0] sm:$0xff] %v981
        %1046 = vst [vmem:[%s265 + $0xc8] sm:$0xff] %v982
        %1047 = vst [vmem:[%s265 + $0xd0] sm:$0xff] %v983
        %1048 = vst [vmem:[%s265 + $0xd8] sm:$0xff] %v984
        %1049 = vst [vmem:[%s265 + $0xe0] sm:$0xff] %v985
        %1050 = vst [vmem:[%s265 + $0xe8] sm:$0xff] %v986
        %1051 = vst [vmem:[%s265 + $0xf0] sm:$0xff] %v987
        %1052 = vst [vmem:[%s265 + $0xf8] sm:$0xff] %v988
        %1053 = vst [vmem:[%s265 + $0x100] sm:$0xff] %v989
        %1054 = vst [vmem:[%s265 + $0x108] sm:$0xff] %v990
        %1055 = vst [vmem:[%s265 + $0x110] sm:$0xff] %v991
        %1056 = vst [vmem:[%s265 + $0x118] sm:$0xff] %v992
        %1057 = vst [vmem:[%s265 + $0x120] sm:$0xff] %v993
        %1058 = vst [vmem:[%s265 + $0x128] sm:$0xff] %v994
        %1059 = vst [vmem:[%s265 + $0x130] sm:$0xff] %v995
        %1060 = vst [vmem:[%s265 + $0x138] sm:$0xff] %v996
        %1061 = vst [vmem:[%s265 + $0x140] sm:$0xff] %v997
        %1062 = vst [vmem:[%s265 + $0x148] sm:$0xff] %v998
        %1063 = vst [vmem:[%s265 + $0x150] sm:$0xff] %v999
        %1064 = vst [vmem:[%s265 + $0x158] sm:$0xff] %v1000
        %1065 = vst [vmem:[%s265 + $0x160] sm:$0xff] %v1001
        %1066 = vst [vmem:[%s265 + $0x168] sm:$0xff] %v1002
        %1067 = vst [vmem:[%s265 + $0x170] sm:$0xff] %v1003
        %1068 = vst [vmem:[%s265 + $0x178] sm:$0xff] %v1004
        %1069 = vst [vmem:[%s265 + $0x180] sm:$0xff] %v1005
        %1070 = vst [vmem:[%s265 + $0x188] sm:$0xff] %v1006
        %1071 = vst [vmem:[%s265 + $0x190] sm:$0xff] %v1007
        %1072 = vst [vmem:[%s265 + $0x198] sm:$0xff] %v1008
        %1073 = vst [vmem:[%s265 + $0x1a0] sm:$0xff] %v1009
        %1074 = vst [vmem:[%s265 + $0x1a8] sm:$0xff] %v1010
        %1075 = vst [vmem:[%s265 + $0x1b0] sm:$0xff] %v1011
        %1076 = vst [vmem:[%s265 + $0x1b8] sm:$0xff] %v1012
        %1077 = vst [vmem:[%s265 + $0x1c0] sm:$0xff] %v1013
        %1078 = vst [vmem:[%s265 + $0x1c8] sm:$0xff] %v1014
        %1079 = vst [vmem:[%s265 + $0x1d0] sm:$0xff] %v1015
        %1080 = vst [vmem:[%s265 + $0x1d8] sm:$0xff] %v1016
        %1081 = vst [vmem:[%s265 + $0x1e0] sm:$0xff] %v1017
        %1082 = vst [vmem:[%s265 + $0x1e8] sm:$0xff] %v1018
        %1083 = vst [vmem:[%s265 + $0x1f0] sm:$0xff] %v1019
        %1084 = vst [vmem:[%s265 + $0x1f8] sm:$0xff] %v1020
        %s1085 = sand.u32 %s121, 1
        %s1086 = scalar_lea.sflag [#allocation4], %s1085
        %s1087 = sand.u32 %s121, 1
        %s1088 = smul.addr %s1087, 512
        %s1089 = scalar_lea.vmem [#allocation8], %s1088
        // Predicated region
        $region45: #{tpu_custom_call.1} parent=31 // pred_check
          %p1090 = pneg %p131
        $region46: #{tpu_custom_call.1} parent=31 // pred_check_branch
          %1092 = sbr.rel (%p1090) target = $region48
        $region47: #{tpu_custom_call.1} parent=31 // pred_region
          %s1093 = smul.u32 32, %s25
          %s1094 = smul.u32 4, %s26
          %1096 = vsyncadd %s1086, 0
          %s1097 = smul.addr %s1093, 8
          %s1098 = sadd.s32 %s1094, %s1097
          %s1099 = smul.addr %s1098, 4
          %s1100 = scalar_lea.hbm %s3, %s1099
          %s1101 = sshll.u32 %s1089, 4
          %s1102 = int_to_ptr.vmem [resolvable:$true] %s1101
          %s1103 = sshll.u32 %s1100, 4
          %s1104 = int_to_ptr.hbm [resolvable:$true] %s1103
          %1109 = dma.vmem_to_hbm [thread:$0]  %s1102, 8192, %s1104, %s1086, 256, 512, 16
        $region48: #{tpu_custom_call.1} parent=31 // pred_fallthru
          _
      $region32: #{tpu_custom_call.1} parent=5 // pred_fallthru
        _
      %p1110 = scmp.le.s32.totalorder 2, %s16
      // Predicated region
      $region49: #{tpu_custom_call.1} parent=5 // pred_check
        %p1111 = pneg %p1110
      $region50: #{tpu_custom_call.1} parent=5 // pred_check_branch
        %1113 = sbr.rel (%p1111) target = $region52
      $region51: #{tpu_custom_call.1} parent=5 // pred_region
        %s1114 = ssub.s32 %s16, 2
        // Predicated region
        $region53: #{tpu_custom_call.1} parent=51 // pred_check
          %p1115 = pneg %p137
        $region54: #{tpu_custom_call.1} parent=51 // pred_check_branch
          %1117 = sbr.rel (%p1115) target = $region56
        $region55: #{tpu_custom_call.1} parent=51 // pred_region
          %s1118 = sand.u32 %s122, 1
          %s1119 = scalar_lea.sflag [#allocation4], %s1118
          %s1120 = sand.u32 %s122, 1
          %s1121 = smul.addr %s1120, 512
          %s1122 = scalar_lea.vmem [#allocation8], %s1121
          %1124 = dma.done %s1119, 8192
        $region56: #{tpu_custom_call.1} parent=51 // pred_fallthru
          _
      $region52: #{tpu_custom_call.1} parent=5 // pred_fallthru
        _
    $region6: #{tpu_custom_call.1} parent=1 // loop_footer
      %s20 = sadd.s32 1, %s16
    $region7: #{tpu_custom_call.1} parent=1 // loop_footer_branch
      %15 = sbr.rel target = $region3
    $region8: #{tpu_custom_call.1} parent=1 // loop_exit
      _
    %1125 = vsyncpa [#allocation3], 1
    %s1126 = scalar_lea.sflag [#allocation3], 1
    %1127 = vsyncpa %s1126, 1
    %1128 = vsyncpa [#allocation6], 1
    %s1129 = scalar_lea.sflag [#allocation6], 1
    %1130 = vsyncpa %s1129, 1
    %1131 = vsyncpa [#allocation4], 1
    %s1132 = scalar_lea.sflag [#allocation4], 1
    %1133 = vsyncpa %s1132, 1

</llo_original>
